<compile_context>
chip_gen: v7x
topology: tpu7x:2x2x1
jax: 0.10.0
libtpu: 0.0.40
codegen_flags: <defaults>
</compile_context>

<pallas_src>
import functools

import jax
import jax.numpy as jnp
from jax import lax
from jax.experimental import pallas as pl
from jax.experimental.pallas import tpu as pltpu

_LANES = 128
_SUBLANES = 8
_MAX_TILE_M = 8192                 # (8192,128) f32 tile = 4 MiB; x2 inputs x2 buffers = 16 MiB
_VMEM_LIMIT_BYTES = 32 * 1024 * 1024


def _hinge_kernel(cp_ref, c_ref, out_ref, acc_ref, *,
                  rows, tile_m, tiles_per_core, needs_mask):
    i = pl.program_id(1)  # reduction axis within this core's slice

    @pl.when(i == 0)
    def _init():
        acc_ref[...] = jnp.zeros_like(acc_ref)

    # Upcast (bf16/f16 -> f32 is free VPU work hidden under the DMA).
    cp = cp_ref[...].astype(jnp.float32)
    cc = c_ref[...].astype(jnp.float32)
    r = jnp.maximum(1.0 - 2.0 * cp * cc, 0.0)

    if needs_mask:
        # Only the trailing partial row-tile contains out-of-bounds rows; zero them.
        t = pl.program_id(0) * tiles_per_core + i
        row_id = t * tile_m + lax.broadcasted_iota(jnp.int32, (tile_m, 1), 0)
        r = jnp.where(row_id < rows, r, 0.0)

    # Fold sublane-tiles on the VPU only; keep a vreg-shaped running sum.
    acc_ref[...] += r.reshape(tile_m // _SUBLANES, _SUBLANES, _LANES).sum(axis=0)

    @pl.when(i == pl.num_programs(1) - 1)
    def _finalize():
        out_ref[...] = acc_ref[...].reshape(1, _SUBLANES, _LANES)


def _prep_dtype(x):
    x = jnp.asarray(x)
    if x.dtype in (jnp.float32, jnp.bfloat16, jnp.float16):
        return x
    return x.astype(jnp.float32)


def hinge_loss(c_pred, c):
    """Pallas implementation of HingeLoss.forward.

    c_pred, c: arrays of identical shape (reference uses (N, 1)).
    Returns a (1, 1) float32 array: sum max(0, 1 - 2 * c_pred * c).
    """
    c_pred = _prep_dtype(c_pred)
    c = _prep_dtype(c)
    assert c_pred.shape == c.shape

    total = int(c_pred.size)
    # Lane-dense slab: at least 8 rows so block shapes stay (8k, 128)-aligned.
    rows = max(-(-total // _LANES), _SUBLANES)
    padded_total = rows * _LANES
    pad = padded_total - total

    def _slab(x):
        flat = x.reshape(-1)
        if pad:
            # Pad value 1.0 -> max(0, 1 - 2*1*1) = 0; fuses into the input DMA
            # via allow_input_fusion. Fast path (pad == 0) is reshape-only.
            flat = jnp.pad(flat, (0, pad), constant_values=1.0)
        return flat.reshape(rows, _LANES)

    cp2 = _slab(c_pred)
    c2 = _slab(c)

    tile_m = min(_MAX_TILE_M, (rows // _SUBLANES) * _SUBLANES)   # multiple of 8, >= 8
    n_tiles = -(-rows // tile_m)
    needs_mask = (rows % tile_m) != 0

    # Dual-TensorCore split (v7x): only when the tile count splits evenly so no
    # fully out-of-bounds blocks are ever addressed. Harmless on single-TC chips.
    num_split = 2 if (n_tiles >= 2 and n_tiles % 2 == 0) else 1
    tiles_per_core = n_tiles // num_split

    kernel = functools.partial(
        _hinge_kernel, rows=rows, tile_m=tile_m,
        tiles_per_core=tiles_per_core, needs_mask=needs_mask)

    in_map = lambda cidx, i: (cidx * tiles_per_core + i, 0)
    bytes_in = padded_total * (cp2.dtype.itemsize + c2.dtype.itemsize)

    partials = pl.pallas_call(
        kernel,
        out_shape=jax.ShapeDtypeStruct((num_split, _SUBLANES, _LANES), jnp.float32),
        grid_spec=pltpu.PrefetchScalarGridSpec(
            num_scalar_prefetch=0,
            grid=(num_split, tiles_per_core),
            in_specs=[
                pl.BlockSpec((tile_m, _LANES), in_map),
                pl.BlockSpec((tile_m, _LANES), in_map),
            ],
            out_specs=pl.BlockSpec((1, _SUBLANES, _LANES),
                                   lambda cidx, i: (cidx, 0, 0)),
            scratch_shapes=[pltpu.VMEM((_SUBLANES, _LANES), jnp.float32)],
        ),
        compiler_params=pltpu.CompilerParams(
            dimension_semantics=("parallel", "arbitrary"),
            vmem_limit_bytes=_VMEM_LIMIT_BYTES,
            allow_input_fusion=[True, True],
        ),
        cost_estimate=pl.CostEstimate(
            flops=5 * padded_total,
            transcendentals=0,
            bytes_accessed=bytes_in + num_split * _SUBLANES * _LANES * 4,
        ),
    )(cp2, c2)

    # Tiny final reduce of the per-core (8,128) partials; keeps XLU work out of
    # the kernel's per-step loop entirely.
    return jnp.sum(partials, dtype=jnp.float32).reshape(1, 1)


def _reference(c_pred, c):
    cp = jnp.asarray(c_pred, jnp.float32)
    cc = jnp.asarray(c, jnp.float32)
    return jnp.sum(jnp.maximum(1.0 - 2.0 * cp * cc, 0.0)).reshape(1, 1)


if __name__ == "__main__":
    key = jax.random.PRNGKey(0)
    # Matches the spec: c_pred = torch.rand(2).view(2, -1) -> (2, 1)
    c_pred = jax.random.uniform(key, (2, 1), dtype=jnp.float32)
    # c from SPOPlus.get_output(); deterministic (2, 1) stand-in.
    c = jnp.array([[1.0], [2.0]], dtype=jnp.float32)

    out = hinge_loss(c_pred, c)
    jax.block_until_ready(out)
    assert out.shape == (1, 1)
    assert jnp.allclose(out, _reference(c_pred, c), atol=1e-6), (out,)

    # Larger, lane-unaligned case (pads only to the next 128 multiple; trailing
    # partial row-tile is masked in-kernel).
    k2, k3 = jax.random.split(jax.random.PRNGKey(1))
    big_cp = jax.random.uniform(k2, (5000, 1), dtype=jnp.float32)
    big_c = jax.random.normal(k3, (5000, 1), dtype=jnp.float32)
    out_big = hinge_loss(big_cp, big_c)
    jax.block_until_ready(out_big)
    assert jnp.allclose(out_big, _reference(big_cp, big_c),
                        rtol=1e-5, atol=1e-4), (out_big,)

    # Lane-aligned fast path (zero-copy reshape), multi-tile, dual-core split,
    # bf16 streaming with in-kernel upcast.
    k4, k5 = jax.random.split(jax.random.PRNGKey(2))
    n3 = 2 * _MAX_TILE_M * _LANES  # 2 full tiles -> num_split = 2
    hp_cp = jax.random.uniform(k4, (n3, 1), dtype=jnp.float32).astype(jnp.bfloat16)
    hp_c = jax.random.normal(k5, (n3, 1), dtype=jnp.float32).astype(jnp.bfloat16)
    out_hp = hinge_loss(hp_cp, hp_c)
    jax.block_until_ready(out_hp)
    assert jnp.allclose(out_hp, _reference(hp_cp, hp_c),
                        rtol=1e-4, atol=1e-2), (out_hp,)

    print("KERNEL_OK")
</pallas_src>

<mosaic_0001>
module attributes {stable_mosaic.version = 11 : i64} {
  func.func @_hinge_kernel(%arg0: i32, %arg1: i32, %arg2: memref<8x128xf32, #tpu.memory_space<vmem>>, %arg3: memref<8x128xf32, #tpu.memory_space<vmem>>, %arg4: memref<1x8x128xf32, #tpu.memory_space<vmem>>, %arg5: memref<8x128xf32, #tpu.memory_space<vmem>>) attributes {dimension_semantics = [#tpu.dimension_semantics<parallel>, #tpu.dimension_semantics<arbitrary>], iteration_bounds = array<i64: 1, 1>, scalar_prefetch = 0 : i64, scratch_operands = 1 : i64, tpu.core_type = #tpu.core_type<tc>, window_params = [{transform_indices = @transform_0, window_bounds = array<i64: 8, 128>}, {transform_indices = @transform_1, window_bounds = array<i64: 8, 128>}, {transform_indices = @transform_2, window_bounds = array<i64: 1, 8, 128>}]} {
    %c0_i32 = arith.constant 0 : i32
    %0 = arith.cmpi eq, %arg1, %c0_i32 : i32
    %1 = arith.extui %0 : i1 to i32
    %c0_i32_0 = arith.constant 0 : i32
    %2 = arith.cmpi ne, %1, %c0_i32_0 : i32
    scf.if %2 {
      %cst_13 = arith.constant 0.000000e+00 : f32
      %20 = vector.broadcast %cst_13 : f32 to vector<8x128xf32>
      %c0_14 = arith.constant 0 : index
      %c0_15 = arith.constant 0 : index
      %21 = vector.load %arg5[%c0_14, %c0_15] : memref<8x128xf32, #tpu.memory_space<vmem>>, vector<8x128xf32>
      tpu.vector_store %arg5[%c0_14, %c0_15], %20 {strides = array<i32>} : memref<8x128xf32, #tpu.memory_space<vmem>>, vector<8x128xf32>,
    } else {
    }
    %c0 = arith.constant 0 : index
    %c0_1 = arith.constant 0 : index
    %3 = vector.load %arg2[%c0, %c0_1] : memref<8x128xf32, #tpu.memory_space<vmem>>, vector<8x128xf32>
    %c0_2 = arith.constant 0 : index
    %c0_3 = arith.constant 0 : index
    %4 = vector.load %arg3[%c0_2, %c0_3] : memref<8x128xf32, #tpu.memory_space<vmem>>, vector<8x128xf32>
    %cst = arith.constant 2.000000e+00 : f32
    %5 = vector.broadcast %cst : f32 to vector<8x128xf32>
    %6 = arith.mulf %5, %3 : vector<8x128xf32>
    %7 = arith.mulf %6, %4 : vector<8x128xf32>
    %cst_4 = arith.constant 1.000000e+00 : f32
    %8 = vector.broadcast %cst_4 : f32 to vector<8x128xf32>
    %9 = arith.subf %8, %7 : vector<8x128xf32>
    %cst_5 = arith.constant 0.000000e+00 : f32
    %10 = vector.broadcast %cst_5 : f32 to vector<8x128xf32>
    %11 = arith.maximumf %9, %10 : vector<8x128xf32>
    %c0_6 = arith.constant 0 : index
    %c0_7 = arith.constant 0 : index
    %12 = vector.load %arg5[%c0_6, %c0_7] : memref<8x128xf32, #tpu.memory_space<vmem>>, vector<8x128xf32>
    %13 = vector.shape_cast %11 : vector<8x128xf32> to vector<1x8x128xf32>
    %cst_8 = arith.constant dense<0.000000e+00> : vector<8x128xf32>
    %14 = vector.multi_reduction <add>, %13, %cst_8 [0] : vector<1x8x128xf32> to vector<8x128xf32>
    %15 = arith.addf %12, %14 : vector<8x128xf32>
    %c0_9 = arith.constant 0 : index
    %c0_10 = arith.constant 0 : index
    %16 = vector.load %arg5[%c0_9, %c0_10] : memref<8x128xf32, #tpu.memory_space<vmem>>, vector<8x128xf32>
    tpu.vector_store %arg5[%c0_9, %c0_10], %15 {strides = array<i32>} : memref<8x128xf32, #tpu.memory_space<vmem>>, vector<8x128xf32>,
    %c0_i32_11 = arith.constant 0 : i32
    %17 = arith.cmpi eq, %arg1, %c0_i32_11 : i32
    %18 = arith.extui %17 : i1 to i32
    %c0_i32_12 = arith.constant 0 : i32
    %19 = arith.cmpi ne, %18, %c0_i32_12 : i32
    scf.if %19 {
      %c0_13 = arith.constant 0 : index
      %c0_14 = arith.constant 0 : index
      %20 = vector.load %arg5[%c0_13, %c0_14] : memref<8x128xf32, #tpu.memory_space<vmem>>, vector<8x128xf32>
      %21 = vector.shape_cast %20 : vector<8x128xf32> to vector<1x8x128xf32>
      %c0_15 = arith.constant 0 : index
      %c0_16 = arith.constant 0 : index
      %c0_17 = arith.constant 0 : index
      %22 = vector.load %arg4[%c0_15, %c0_16, %c0_17] : memref<1x8x128xf32, #tpu.memory_space<vmem>>, vector<1x8x128xf32>
      tpu.vector_store %arg4[%c0_15, %c0_16, %c0_17], %21 {strides = array<i32>} : memref<1x8x128xf32, #tpu.memory_space<vmem>>, vector<1x8x128xf32>,
    } else {
    }
    return
  }
  func.func @transform_0(%arg0: i32, %arg1: i32) -> (i32, i32) {
    %c1_i32 = arith.constant 1 : i32
    %0 = arith.muli %arg0, %c1_i32 : i32
    %1 = arith.addi %0, %arg1 : i32
    %c0_i32 = arith.constant 0 : i32
    %c0_i32_0 = arith.constant 0 : i32
    return %1, %c0_i32 : i32, i32
  }
  func.func @transform_1(%arg0: i32, %arg1: i32) -> (i32, i32) {
    %c1_i32 = arith.constant 1 : i32
    %0 = arith.muli %arg0, %c1_i32 : i32
    %1 = arith.addi %0, %arg1 : i32
    %c0_i32 = arith.constant 0 : i32
    %c0_i32_0 = arith.constant 0 : i32
    return %1, %c0_i32 : i32, i32
  }
  func.func @transform_2(%arg0: i32, %arg1: i32) -> (i32, i32, i32) {
    %c0_i32 = arith.constant 0 : i32
    %c0_i32_0 = arith.constant 0 : i32
    %c0_i32_1 = arith.constant 0 : i32
    return %arg0, %c0_i32, %c0_i32_0 : i32, i32, i32
  }
}

</mosaic_0001>

<llo_original>
// kernel: tpu_custom_call.1
$region0: #{tpu_custom_call.1}
  #allocation0 [shape = 'u32[]', space=smem, size = 0x4, offset = 0x4, fixed_abs, tag = 'smem constant byte address 0x4 - core index']
  #allocation1 [shape = 'u32[144,128]{1,0:T(1,128)}', space=vmem, size = 0x12000, scoped, tag = 'internal scratch']
  #allocation2 [shape = 'f32[8,128]{1,0:T(8,128)}', space=vmem, size = 0x1000, scoped, tag = 'scratch operand']
  %s0 = inlined_call_operand.hbm [shape: f32[8,128], index: 0, kind: input, shape index: {}]
  %s1 = inlined_call_operand.hbm [shape: f32[8,128], index: 1, kind: input, shape index: {}]
  %s2 = inlined_call_operand.hbm [shape: f32[1,8,128], index: 2, kind: output, shape index: {}]
  %s3 = sld [smem:[#allocation0]]
  $region34: #{tpu_custom_call.1} parent=0
    _
  %s5 = ssub.s32 1, %s3
  %s6 = scalar_select 0, %s5, %s3
  $region1: #{tpu_custom_call.1} parent=0
    #allocation3 [shape = 'u8[4096]{0}', space=vmem, size = 0x1000, scoped, tag = 'input window, operand 0, single buffered']
    #allocation4 [shape = 's32[1]{0}', space=sflag, size = 0x4, scoped, tag = 'scoped memory for tpu_custom_call.1']
    #allocation5 [shape = 's32[1]{0}', space=sflag, size = 0x4, scoped, tag = 'scoped memory for tpu_custom_call.1']
    #allocation6 [shape = 'u8[4096]{0}', space=vmem, size = 0x1000, scoped, tag = 'input window, operand 1, single buffered']
    #allocation7 [shape = 's32[1]{0}', space=sflag, size = 0x4, scoped, tag = 'scoped memory for tpu_custom_call.1']
    #allocation8 [shape = 'u8[4096]{0}', space=vmem, size = 0x1000, scoped, tag = 'output window, operand 0, single buffered']
    %7 = vsyncpa [#allocation4], 0
    %8 = vsyncpa [#allocation7], 0
    %9 = vsyncpa [#allocation5], 0
    // Predicated region
    $region2: #{tpu_custom_call.1} parent=1 // pred_check
      _
    $region3: #{tpu_custom_call.1} parent=1 // pred_check_branch
      %11 = sbr.rel (0) target = $region5
    $region4: #{tpu_custom_call.1} parent=1 // pred_region
      %s12 = sadd.s32 0, 0
      %s14 = ssub.s32 128, 128
      %15 = vsyncadd [#allocation4], %s14
      %s16 = smul.addr %s12, 128
      %s17 = scalar_lea.hbm %s0, %s16
      %s19 = sshll.u32 [#allocation3], 4
      %s20 = int_to_ptr.vmem [resolvable:$true] %s19
      %22 = dma.hbm_to_vmem [thread:$0]  %s17, 128, %s20, [#allocation4]
    $region5: #{tpu_custom_call.1} parent=1 // pred_fallthru
      _
    // Predicated region
    $region6: #{tpu_custom_call.1} parent=1 // pred_check
      _
    $region7: #{tpu_custom_call.1} parent=1 // pred_check_branch
      %24 = sbr.rel (0) target = $region9
    $region8: #{tpu_custom_call.1} parent=1 // pred_region
      %s25 = sadd.s32 0, 0
      %s27 = ssub.s32 128, 128
      %28 = vsyncadd [#allocation7], %s27
      %s29 = smul.addr %s25, 128
      %s30 = scalar_lea.hbm %s1, %s29
      %s32 = sshll.u32 [#allocation6], 4
      %s33 = int_to_ptr.vmem [resolvable:$true] %s32
      %35 = dma.hbm_to_vmem [thread:$0]  %s30, 128, %s33, [#allocation7]
    $region9: #{tpu_custom_call.1} parent=1 // pred_fallthru
      _
    // Predicated region
    $region10: #{tpu_custom_call.1} parent=1 // pred_check
      _
    $region11: #{tpu_custom_call.1} parent=1 // pred_check_branch
      %37 = sbr.rel (0) target = $region13
    $region12: #{tpu_custom_call.1} parent=1 // pred_region
      %38 = dma.done [#allocation4], 128
    $region13: #{tpu_custom_call.1} parent=1 // pred_fallthru
      _
    // Predicated region
    $region14: #{tpu_custom_call.1} parent=1 // pred_check
      _
    $region15: #{tpu_custom_call.1} parent=1 // pred_check_branch
      %40 = sbr.rel (0) target = $region17
    $region16: #{tpu_custom_call.1} parent=1 // pred_region
      %41 = dma.done [#allocation7], 128
    $region17: #{tpu_custom_call.1} parent=1 // pred_fallthru
      _
    %s42 = sadd.s32 0, 0
    %s43 = sadd.s32 0, 0
    %p44 = scmp.eq.s32.totalorder 0, 0
    // Predicated region
    $region18: #{tpu_custom_call.1} parent=1 // pred_check
      %p45 = pneg %p44
    $region19: #{tpu_custom_call.1} parent=1 // pred_check_branch
      %47 = sbr.rel (%p45) target = $region21
    $region20: #{tpu_custom_call.1} parent=1 // pred_region
      %48 = vst [vmem:[#allocation2] sm:$0xff] 0.0
    $region21: #{tpu_custom_call.1} parent=1 // pred_fallthru
      _
    %v49 = vld [vmem:[#allocation3] sm:$0xff]
    %v50 = vld [vmem:[#allocation6] sm:$0xff]
    %v51 = vmul.f32 %v49, 2.0
    %v52 = vmul.f32 %v51, %v50
    %v53 = vsub.f32 1.0, %v52
    %v54 = vmax.f32 %v53, 0.0
    %v55 = vld [vmem:[#allocation2] sm:$0xff]
    %v56 = vadd.f32 %v54, 0.0
    %v57 = vadd.f32 %v55, %v56
    %58 = vst [vmem:[#allocation2] sm:$0xff] %v57
    // Predicated region
    $region22: #{tpu_custom_call.1} parent=1 // pred_check
      %p59 = pneg %p44
    $region23: #{tpu_custom_call.1} parent=1 // pred_check_branch
      %61 = sbr.rel (%p59) target = $region25
    $region24: #{tpu_custom_call.1} parent=1 // pred_region
      %v62 = vld [vmem:[#allocation2] sm:$0xff]
      %63 = vst [vmem:[#allocation8] sm:$0xff] %v62
    $region25: #{tpu_custom_call.1} parent=1 // pred_fallthru
      _
    // Predicated region
    $region26: #{tpu_custom_call.1} parent=1 // pred_check
      _
    $region27: #{tpu_custom_call.1} parent=1 // pred_check_branch
      %65 = sbr.rel (0) target = $region29
    $region28: #{tpu_custom_call.1} parent=1 // pred_region
      %s67 = ssub.s32 128, 128
      %68 = vsyncadd [#allocation5], %s67
      %s70 = sshll.u32 [#allocation8], 4
      %s71 = int_to_ptr.vmem [resolvable:$true] %s70
      %73 = dma.vmem_to_hbm [thread:$0]  %s71, 128, %s2, [#allocation5]
    $region29: #{tpu_custom_call.1} parent=1 // pred_fallthru
      _
    // Predicated region
    $region30: #{tpu_custom_call.1} parent=1 // pred_check
      _
    $region31: #{tpu_custom_call.1} parent=1 // pred_check_branch
      %75 = sbr.rel (0) target = $region33
    $region32: #{tpu_custom_call.1} parent=1 // pred_region
      %76 = dma.done [#allocation5], 128
    $region33: #{tpu_custom_call.1} parent=1 // pred_fallthru
      _
    %77 = vsyncpa [#allocation4], 1
    %78 = vsyncpa [#allocation7], 1
    %79 = vsyncpa [#allocation5], 1

</llo_original>
